<compile_context>
chip_gen: v5e
topology: v5e:2x2
jax: 0.10.0
libtpu: 0.0.40
codegen_flags: <defaults>
</compile_context>

<pallas_src>
import jax
import jax.numpy as jnp
from jax.experimental import pallas as pl
from jax.experimental.pallas import tpu as pltpu


def _round_up(x, m):
    return (x + m - 1) // m * m


# --------------------------------------------------------------------------------------
# Kernel 1: one-shot weight standardization.
#   in : (kh*kw, O_pad, C) raw weight, f32, zero-padded along O (to a multiple of 8).
#   out: (kh*kw, O_pad, C) standardized weight in the MXU dtype.
# Padded output channels are all-zero -> mean 0, var 0 -> standardized to exactly 0.
# --------------------------------------------------------------------------------------
def _standardize_kernel(w_ref, out_ref):
    w = w_ref[...].astype(jnp.float32)                      # (kh*kw, O_pad, C)
    k = w.shape[0] * w.shape[2]                             # fan-in per output channel
    # per-output-channel mean over (kh*kw, C): lane reduce, then major-axis reduce.
    s = jnp.sum(jnp.sum(w, axis=2, keepdims=True), axis=0, keepdims=True)
    wc = w - s / k
    # unbiased variance (torch.Tensor.std default).  NOTE: k == 1 gives NaN, same as torch.
    ss = jnp.sum(jnp.sum(wc * wc, axis=2, keepdims=True), axis=0, keepdims=True)
    std = jnp.sqrt(ss / (k - 1)) + 1e-5                     # eps OUTSIDE the sqrt
    out_ref[...] = (wc / std).astype(out_ref.dtype)


# --------------------------------------------------------------------------------------
# Kernel 2: the conv.  One grid step = one image x one block of `th` output rows.
#   w_ref    : (kh*kw, O_pad, C)      standardized weight (constant index map -> resident)
#   xmain_ref: (1, th*stride, C, Wp)  input rows feeding this output-row block
#   halo refs: (1, 1, C, Wp) each     the max(0, kh - stride) extra bottom rows
#   o_ref    : (1, O_pad, th, Wo)     f32 output block, already in NCHW order
# All loop indices are static Python ints -> fully static indexing, unrolled matmuls.
# --------------------------------------------------------------------------------------
def _make_conv_kernel(kh, kw, stride, th, wo, n_halo):
    def kernel(w_ref, xmain_ref, *rest):
        halo_refs = rest[:n_halo]
        o_ref = rest[n_halo]

        # hoist the (tiny) weight tiles once; reused by every output row in the block
        w_tiles = [w_ref[idx] for idx in range(kh * kw)]

        def input_cols(d, j):
            # (C, Wo) slab: input row at offset d, columns j, j+stride, j+2*stride, ...
            col = slice(j, j + wo) if stride == 1 else pl.ds(j, wo, stride=stride)
            if d < th * stride:
                return xmain_ref[0, d, :, col]
            return halo_refs[d - th * stride][0, 0, :, col]

        for r in range(th):                                  # output row within the block
            acc = None
            for i in range(kh):
                d = r * stride + i
                for j in range(kw):
                    part = jnp.dot(w_tiles[i * kw + j], input_cols(d, j),
                                   preferred_element_type=jnp.float32)
                    acc = part if acc is None else acc + part
            o_ref[0, :, r, :] = acc.astype(o_ref.dtype)

    return kernel


def _pick_row_block(n, ho):
    """Output-row block: a divisor of Ho that is a multiple of 8 (layout-clean), preferring
    one that leaves >= 4 grid steps so both v7x TensorCores get prefetch overlap."""
    chosen = None
    for cand in (16, 8):
        if ho % cand == 0:
            if chosen is None:
                chosen = cand
            if n * (ho // cand) >= 4:
                return cand
    if chosen is not None:
        return chosen
    # TODO(synk): Ho with no multiple-of-8 divisor falls back to a full-extent row block;
    #             fine for small images, unroll/VMEM would need revisiting for huge odd Ho.
    return ho


def weight_standardized_conv2d(x, weight, stride=1, padding=0, *,
                               mxu_dtype=jnp.bfloat16):
    """x: (N, C, H, W) f32; weight: (O, C, kh, kw) f32.  bias=False, groups=1, dilation=1."""
    n, c, h, w_in = x.shape
    o, cw, kh, kw = weight.shape
    assert cw == c, "groups != 1 not supported"
    ho = (h + 2 * padding - kh) // stride + 1
    wo = (w_in + 2 * padding - kw) // stride + 1
    hp, wp = h + 2 * padding, w_in + 2 * padding
    assert ho >= 1 and wo >= 1

    # ---- weight -> (kh*kw, O_pad, C) and standardize once (not per grid step) ----
    o_pad = _round_up(o, 8)                       # sublane rounding only; no 128-lane pad
    w_r = weight.transpose(2, 3, 0, 1).reshape(kh * kw, o, c)
    w_r = jnp.pad(w_r, ((0, 0), (0, o_pad - o), (0, 0)))
    w_std = pl.pallas_call(
        _standardize_kernel,
        out_shape=jax.ShapeDtypeStruct((kh * kw, o_pad, c), mxu_dtype),
        grid=(1,),
        in_specs=[pl.BlockSpec((kh * kw, o_pad, c), lambda i: (0, 0, 0))],
        out_specs=pl.BlockSpec((kh * kw, o_pad, c), lambda i: (0, 0, 0)),
    )(w_r)

    # ---- x: single fused wrapper pass  NCHW -> spatial pad -> (N, Hp, C, Wp) -> MXU dtype ----
    xp = jnp.pad(x, ((0, 0), (0, 0), (padding, padding), (padding, padding)))
    xp = jnp.transpose(xp, (0, 2, 1, 3)).astype(mxu_dtype)      # (N, Hp, C, Wp)

    th = _pick_row_block(n, ho)                    # output rows per grid step
    n_halo = max(0, kh - stride)                   # extra bottom input rows per block

    kernel = _make_conv_kernel(kh, kw, stride, th, wo, n_halo)

    in_specs = [
        # resident standardized weight (constant index map -> fetched once, stays in VMEM)
        pl.BlockSpec((kh * kw, o_pad, c), lambda nb, yb: (0, 0, 0)),
        # main input-row slab for this output-row block (block-index * th*stride = row offset)
        pl.BlockSpec((1, th * stride, c, wp), lambda nb, yb: (nb, yb, 0, 0)),
    ]
    for e in range(n_halo):
        # block size 1 along Hp => index_map value is the element row index (any offset OK)
        in_specs.append(pl.BlockSpec(
            (1, 1, c, wp),
            lambda nb, yb, e=e: (nb, yb * (th * stride) + th * stride + e, 0, 0)))

    itm = jnp.dtype(mxu_dtype).itemsize
    est = 2 * (kh * kw * o_pad * c * itm            # weight (double-buffered)
               + th * stride * c * wp * itm         # main row slab
               + n_halo * c * wp * itm              # halo rows
               + o_pad * th * wo * 4)               # output block
    vmem_limit = int(min(64 * 2 ** 20, max(4 * est, 16 * 2 ** 20)))

    out = pl.pallas_call(
        kernel,
        out_shape=jax.ShapeDtypeStruct((n, o_pad, ho, wo), jnp.float32),
        grid=(n, ho // th),
        in_specs=in_specs,
        out_specs=pl.BlockSpec((1, o_pad, th, wo), lambda nb, yb: (nb, 0, yb, 0)),
        compiler_params=pltpu.CompilerParams(
            dimension_semantics=("parallel", "parallel"),   # megacore-safe on v7x
            vmem_limit_bytes=vmem_limit),
    )(w_std, xp, *([xp] * n_halo))

    # Output is already NCHW; just drop the (at most 7) padded output channels.
    return out[:, :o]


def _reference(x, weight, stride=1, padding=0):
    # pure-JAX reference matching the module's math
    o = weight.shape[0]
    mean = weight.mean(axis=(1, 2, 3), keepdims=True)
    wc = weight - mean
    std = jnp.std(wc.reshape(o, -1), axis=1, ddof=1).reshape(-1, 1, 1, 1) + 1e-5
    w_std = wc / std
    return jax.lax.conv_general_dilated(
        x, w_std, (stride, stride), [(padding, padding), (padding, padding)],
        dimension_numbers=("NCHW", "OIHW", "NCHW"))


if __name__ == "__main__":
    key = jax.random.PRNGKey(0)
    kx, kw_key = jax.random.split(key)

    # WeightStandardizedConv2d(in_channels=4, out_channels=8, kernel_size=3,
    #                          stride=1, padding=1, bias=False)
    N, C, H, W = 2, 4, 16, 16
    O, KH, KW = 8, 3, 3
    stride, padding = 1, 1

    x = jax.random.normal(kx, (N, C, H, W), dtype=jnp.float32)
    weight = jax.random.normal(kw_key, (O, C, KH, KW), dtype=jnp.float32) * 0.1

    ref = jax.block_until_ready(_reference(x, weight, stride=stride, padding=padding))

    # f32 MXU path: tight semantic check against the module's math.
    out_f32 = jax.block_until_ready(
        weight_standardized_conv2d(x, weight, stride=stride, padding=padding,
                                   mxu_dtype=jnp.float32))
    assert out_f32.shape == (N, O, H, W), out_f32.shape
    assert jnp.allclose(out_f32, ref, atol=5e-3, rtol=5e-3), \
        float(jnp.max(jnp.abs(out_f32 - ref)))

    # bf16 MXU path (default fast path): error comes only from rounding the matmul
    # operands (accumulation is f32), so compare loosely against the f32 reference.
    out_bf16 = jax.block_until_ready(
        weight_standardized_conv2d(x, weight, stride=stride, padding=padding))
    assert out_bf16.shape == (N, O, H, W), out_bf16.shape
    err = float(jnp.max(jnp.abs(out_bf16 - ref)))
    scale = float(jnp.max(jnp.abs(ref)))
    assert err <= 0.05 * scale + 0.05, (err, scale)

    print("KERNEL_OK")
</pallas_src>

<mosaic_0001>
module attributes {stable_mosaic.version = 11 : i64} {
  func.func @_standardize_kernel(%arg0: i32, %arg1: memref<9x8x4xf32, #tpu.memory_space<vmem>>, %arg2: memref<9x8x4xf32, #tpu.memory_space<vmem>>) attributes {dimension_semantics = [#tpu.dimension_semantics<arbitrary>], iteration_bounds = array<i64: 1>, scalar_prefetch = 0 : i64, scratch_operands = 0 : i64, tpu.core_type = #tpu.core_type<tc>, window_params = [{pipeline_mode = #tpu.pipeline_mode<synchronous>, transform_indices = @transform_0, window_bounds = array<i64: 9, 8, 4>}, {pipeline_mode = #tpu.pipeline_mode<synchronous>, transform_indices = @transform_1, window_bounds = array<i64: 9, 8, 4>}]} {
    %c0 = arith.constant 0 : index
    %c0_0 = arith.constant 0 : index
    %c0_1 = arith.constant 0 : index
    %0 = vector.load %arg1[%c0, %c0_0, %c0_1] : memref<9x8x4xf32, #tpu.memory_space<vmem>>, vector<9x8x4xf32>
    %cst = arith.constant dense<0.000000e+00> : vector<9x8xf32>
    %1 = vector.multi_reduction <add>, %0, %cst [2] : vector<9x8x4xf32> to vector<9x8xf32>
    %2 = vector.shape_cast %1 : vector<9x8xf32> to vector<9x8x1xf32>
    %cst_2 = arith.constant dense<0.000000e+00> : vector<8x1xf32>
    %3 = vector.multi_reduction <add>, %2, %cst_2 [0] : vector<9x8x1xf32> to vector<8x1xf32>
    %4 = vector.shape_cast %3 : vector<8x1xf32> to vector<1x8x1xf32>
    %cst_3 = arith.constant 3.600000e+01 : f32
    %5 = vector.broadcast %cst_3 : f32 to vector<1x8x1xf32>
    %6 = arith.divf %4, %5 : vector<1x8x1xf32>
    %7 = vector.broadcast %6 : vector<1x8x1xf32> to vector<9x8x4xf32>
    %8 = arith.subf %0, %7 : vector<9x8x4xf32>
    %9 = arith.mulf %8, %8 : vector<9x8x4xf32>
    %cst_4 = arith.constant dense<0.000000e+00> : vector<9x8xf32>
    %10 = vector.multi_reduction <add>, %9, %cst_4 [2] : vector<9x8x4xf32> to vector<9x8xf32>
    %11 = vector.shape_cast %10 : vector<9x8xf32> to vector<9x8x1xf32>
    %cst_5 = arith.constant dense<0.000000e+00> : vector<8x1xf32>
    %12 = vector.multi_reduction <add>, %11, %cst_5 [0] : vector<9x8x1xf32> to vector<8x1xf32>
    %13 = vector.shape_cast %12 : vector<8x1xf32> to vector<1x8x1xf32>
    %cst_6 = arith.constant 3.500000e+01 : f32
    %14 = vector.broadcast %cst_6 : f32 to vector<1x8x1xf32>
    %15 = arith.divf %13, %14 : vector<1x8x1xf32>
    %16 = math.sqrt %15 : vector<1x8x1xf32>
    %cst_7 = arith.constant 9.99999974E-6 : f32
    %17 = vector.broadcast %cst_7 : f32 to vector<1x8x1xf32>
    %18 = arith.addf %16, %17 : vector<1x8x1xf32>
    %19 = vector.broadcast %18 : vector<1x8x1xf32> to vector<9x8x4xf32>
    %20 = arith.divf %8, %19 : vector<9x8x4xf32>
    %c0_8 = arith.constant 0 : index
    %c0_9 = arith.constant 0 : index
    %c0_10 = arith.constant 0 : index
    %21 = vector.load %arg2[%c0_8, %c0_9, %c0_10] : memref<9x8x4xf32, #tpu.memory_space<vmem>>, vector<9x8x4xf32>
    tpu.vector_store %arg2[%c0_8, %c0_9, %c0_10], %20 {strides = array<i32>} : memref<9x8x4xf32, #tpu.memory_space<vmem>>, vector<9x8x4xf32>,
    return
  }
  func.func @transform_0(%arg0: i32) -> (i32, i32, i32) {
    %c0_i32 = arith.constant 0 : i32
    %c0_i32_0 = arith.constant 0 : i32
    %c0_i32_1 = arith.constant 0 : i32
    %c0_i32_2 = arith.constant 0 : i32
    return %c0_i32, %c0_i32_0, %c0_i32_1 : i32, i32, i32
  }
  func.func @transform_1(%arg0: i32) -> (i32, i32, i32) {
    %c0_i32 = arith.constant 0 : i32
    %c0_i32_0 = arith.constant 0 : i32
    %c0_i32_1 = arith.constant 0 : i32
    %c0_i32_2 = arith.constant 0 : i32
    return %c0_i32, %c0_i32_0, %c0_i32_1 : i32, i32, i32
  }
}

</mosaic_0001>

<llo_original>
// kernel: tpu_custom_call.1
$region0: #{tpu_custom_call.1}
  #allocation0 [shape = 'u32[]', space=smem, size = 0x4, offset = 0x4, fixed_abs, tag = 'smem constant byte address 0x4 - core index']
  #allocation1 [shape = 'u32[72,128]{1,0:T(1,128)}', space=vmem, size = 0x9000, scoped, tag = 'internal scratch']
  %s0 = inlined_call_operand.vmem [shape: f32[9,8,4], index: 0, kind: input, shape index: {}]
  %s1 = inlined_call_operand.vmem [shape: f32[9,8,4], index: 1, kind: output, shape index: {}]
  %s2 = sld [smem:[#allocation0]]
  $region14: #{tpu_custom_call.1} parent=0
    _
  %s4 = ssub.s32 1, %s2
  %s5 = scalar_select 0, %s4, %s2
  // Predicated region
  $region2: #{tpu_custom_call.1} parent=0 // pred_check
    _
  $region3: #{tpu_custom_call.1} parent=0 // pred_check_branch
    %7 = sbr.rel (0) target = $region5
  $region4: #{tpu_custom_call.1} parent=0 // pred_region
    _
  $region5: #{tpu_custom_call.1} parent=0 // pred_fallthru
    _
  %v8 = vld [vmem:[%s0] sm:$0xff]
  %v9 = vld [vmem:[%s0 + $0x8] sm:$0xff]
  %v10 = vld [vmem:[%s0 + $0x10] sm:$0xff]
  %v11 = vld [vmem:[%s0 + $0x18] sm:$0xff]
  %v12 = vld [vmem:[%s0 + $0x20] sm:$0xff]
  %v13 = vld [vmem:[%s0 + $0x28] sm:$0xff]
  %v14 = vld [vmem:[%s0 + $0x30] sm:$0xff]
  %v15 = vld [vmem:[%s0 + $0x38] sm:$0xff]
  %v16 = vld [vmem:[%s0 + $0x40] sm:$0xff]
  %vm17 = vcmask 31744
  %v18 = vsel %vm17, %v8, 0.0
  %19 = vadd.xlane.f32.xlu0 %v18
  %v20 = vpop.xlane.xlu0 %19
  %v21 = vsel %vm17, %v9, 0.0
  %22 = vadd.xlane.f32.xlu0 %v21
  %v23 = vpop.xlane.xlu0 %22
  %v24 = vsel %vm17, %v10, 0.0
  %25 = vadd.xlane.f32.xlu0 %v24
  %v26 = vpop.xlane.xlu0 %25
  %v27 = vsel %vm17, %v11, 0.0
  %28 = vadd.xlane.f32.xlu0 %v27
  %v29 = vpop.xlane.xlu0 %28
  %v30 = vsel %vm17, %v12, 0.0
  %31 = vadd.xlane.f32.xlu0 %v30
  %v32 = vpop.xlane.xlu0 %31
  %v33 = vsel %vm17, %v13, 0.0
  %34 = vadd.xlane.f32.xlu0 %v33
  %v35 = vpop.xlane.xlu0 %34
  %v36 = vsel %vm17, %v14, 0.0
  %37 = vadd.xlane.f32.xlu0 %v36
  %v38 = vpop.xlane.xlu0 %37
  %v39 = vsel %vm17, %v15, 0.0
  %40 = vadd.xlane.f32.xlu0 %v39
  %v41 = vpop.xlane.xlu0 %40
  %v42 = vsel %vm17, %v16, 0.0
  %43 = vadd.xlane.f32.xlu0 %v42
  %v44 = vpop.xlane.xlu0 %43
  %v45 = vadd.f32 %v20, %v23
  %v46 = vadd.f32 %v45, %v26
  %v47 = vadd.f32 %v46, %v29
  %v48 = vadd.f32 %v47, %v32
  %v49 = vadd.f32 %v48, %v35
  %v50 = vadd.f32 %v49, %v38
  %v51 = vadd.f32 %v50, %v41
  %v52 = vadd.f32 %v51, %v44
  %v53 = vrcp.pop 36.0
  %v54 = vmul.f32 36.0, %v53
  %v55 = vsub.f32 1.0, %v54
  %v56 = vmul.f32 %v53, %v55
  %v57 = vadd.f32 %v53, %v56
  %vm58 = vweird.f32 %v53
  %v59 = vsel %vm58, %v53, %v57
  %v60 = vmul.f32 %v52, %v59
  %v61 = vsub.f32 %v8, %v60
  %v62 = vsub.f32 %v9, %v60
  %v63 = vsub.f32 %v10, %v60
  %v64 = vsub.f32 %v11, %v60
  %v65 = vsub.f32 %v12, %v60
  %v66 = vsub.f32 %v13, %v60
  %v67 = vsub.f32 %v14, %v60
  %v68 = vsub.f32 %v15, %v60
  %v69 = vsub.f32 %v16, %v60
  %v70 = vmul.f32 %v61, %v61
  %v71 = vmul.f32 %v62, %v62
  %v72 = vmul.f32 %v63, %v63
  %v73 = vmul.f32 %v64, %v64
  %v74 = vmul.f32 %v65, %v65
  %v75 = vmul.f32 %v66, %v66
  %v76 = vmul.f32 %v67, %v67
  %v77 = vmul.f32 %v68, %v68
  %v78 = vmul.f32 %v69, %v69
  %v79 = vsel %vm17, %v70, 0.0
  %80 = vadd.xlane.f32.xlu0 %v79
  %v81 = vpop.xlane.xlu0 %80
  %v82 = vsel %vm17, %v71, 0.0
  %83 = vadd.xlane.f32.xlu0 %v82
  %v84 = vpop.xlane.xlu0 %83
  %v85 = vsel %vm17, %v72, 0.0
  %86 = vadd.xlane.f32.xlu0 %v85
  %v87 = vpop.xlane.xlu0 %86
  %v88 = vsel %vm17, %v73, 0.0
  %89 = vadd.xlane.f32.xlu0 %v88
  %v90 = vpop.xlane.xlu0 %89
  %v91 = vsel %vm17, %v74, 0.0
  %92 = vadd.xlane.f32.xlu0 %v91
  %v93 = vpop.xlane.xlu0 %92
  %v94 = vsel %vm17, %v75, 0.0
  %95 = vadd.xlane.f32.xlu0 %v94
  %v96 = vpop.xlane.xlu0 %95
  %v97 = vsel %vm17, %v76, 0.0
  %98 = vadd.xlane.f32.xlu0 %v97
  %v99 = vpop.xlane.xlu0 %98
  %v100 = vsel %vm17, %v77, 0.0
  %101 = vadd.xlane.f32.xlu0 %v100
  %v102 = vpop.xlane.xlu0 %101
  %v103 = vsel %vm17, %v78, 0.0
  %104 = vadd.xlane.f32.xlu0 %v103
  %v105 = vpop.xlane.xlu0 %104
  %v106 = vadd.f32 %v81, %v84
  %v107 = vadd.f32 %v106, %v87
  %v108 = vadd.f32 %v107, %v90
  %v109 = vadd.f32 %v108, %v93
  %v110 = vadd.f32 %v109, %v96
  %v111 = vadd.f32 %v110, %v99
  %v112 = vadd.f32 %v111, %v102
  %v113 = vadd.f32 %v112, %v105
  %v114 = vrcp.pop 35.0
  %v115 = vmul.f32 35.0, %v114
  %v116 = vsub.f32 1.0, %v115
  %v117 = vmul.f32 %v114, %v116
  %v118 = vadd.f32 %v114, %v117
  %vm119 = vweird.f32 %v114
  %v120 = vsel %vm119, %v114, %v118
  %v121 = vmul.f32 %v113, %v120
  %v122 = vrsqrt.pop %v121
  %v123 = vmul.f32 %v122, %v121
  %v124 = vmul.f32 %v123, %v122
  %v125 = vmul.f32 0.5, %v124
  %v126 = vsub.f32 1.5, %v125
  %v127 = vmul.f32 %v122, %v126
  %v128 = vmul.f32 %v121, %v127
  %vm129 = vcmp.eq.f32.partialorder %v121, inf
  %v130 = vsel %vm129, %v121, %v128
  %vm131 = vcmp.eq.f32.partialorder %v121, 0.0
  %v132 = vand.u32 %v121, 2147483648
  %v133 = vsel %vm131, %v132, %v130
  %v134 = vadd.f32 %v133, 1e-05
  %v135 = vrcp.pop %v134
  %v136 = vmul.f32 %v134, %v135
  %v137 = vsub.f32 1.0, %v136
  %v138 = vmul.f32 %v135, %v137
  %v139 = vadd.f32 %v135, %v138
  %vm140 = vweird.f32 %v134
  %vm141 = vweird.f32 %v135
  %vm142 = vmor %vm140, %vm141
  %v143 = vsel %vm142, %v135, %v139
  %v144 = vand.u32 2147483647, %v134
  %vm145 = vcmp.eq.f32.partialorder %v144, 8.507059e+37
  %v146 = vand.u32 %v134, 2147483648
  %v147 = vor.u32 1.1754944e-38, %v146
  %v148 = vsel %vm145, %v147, %v143
  %v149 = vmul.f32 %v61, %v148
  %v150 = vmul.f32 %v62, %v148
  %v151 = vmul.f32 %v63, %v148
  %v152 = vmul.f32 %v64, %v148
  %v153 = vmul.f32 %v65, %v148
  %v154 = vmul.f32 %v66, %v148
  %v155 = vmul.f32 %v67, %v148
  %v156 = vmul.f32 %v68, %v148
  %v157 = vmul.f32 %v69, %v148
  %158 = vst.msk [vmem:[%s1] sm:$0xff] %vm17, %v149
  %159 = vst.msk [vmem:[%s1 + $0x8] sm:$0xff] %vm17, %v150
  %160 = vst.msk [vmem:[%s1 + $0x10] sm:$0xff] %vm17, %v151
  %161 = vst.msk [vmem:[%s1 + $0x18] sm:$0xff] %vm17, %v152
  %162 = vst.msk [vmem:[%s1 + $0x20] sm:$0xff] %vm17, %v153
  %163 = vst.msk [vmem:[%s1 + $0x28] sm:$0xff] %vm17, %v154
  %164 = vst.msk [vmem:[%s1 + $0x30] sm:$0xff] %vm17, %v155
  %165 = vst.msk [vmem:[%s1 + $0x38] sm:$0xff] %vm17, %v156
  %166 = vst.msk [vmem:[%s1 + $0x40] sm:$0xff] %vm17, %v157
  // Predicated region
  $region6: #{tpu_custom_call.1} parent=0 // pred_check
    _
  $region7: #{tpu_custom_call.1} parent=0 // pred_check_branch
    %168 = sbr.rel (0) target = $region9
  $region8: #{tpu_custom_call.1} parent=0 // pred_region
    _
  $region9: #{tpu_custom_call.1} parent=0 // pred_fallthru
    _
  // Predicated region
  $region10: #{tpu_custom_call.1} parent=0 // pred_check
    _
  $region11: #{tpu_custom_call.1} parent=0 // pred_check_branch
    %170 = sbr.rel (0) target = $region13
  $region12: #{tpu_custom_call.1} parent=0 // pred_region
    _
  $region13: #{tpu_custom_call.1} parent=0 // pred_fallthru
    _

</llo_original>
